<compile_context>
chip_gen: v6e
topology: v6e:2x2x1
jax: 0.10.0
libtpu: 0.0.40
codegen_flags: <defaults>
</compile_context>

<pallas_src>
import numpy as np
import jax
import jax.numpy as jnp
from jax.experimental import pallas as pl
from jax.experimental.pallas import tpu as pltpu


# ---------------------------------------------------------------------------
# Parameter construction (plain numpy/JAX glue — mirrors the PyTorch __init__)
# ---------------------------------------------------------------------------
def gram_schmidt_np(vectors: np.ndarray) -> np.ndarray:
    """vectors: (n, 1, h, w) float32 -> orthonormal stack of same shape."""
    out = []
    for x in vectors:
        x = x.astype(np.float64)
        for y in out:
            x = x - (x * y).sum() / (y * y).sum() * y
        x = x / np.sqrt((x * x).sum())
        out.append(x)
    return np.stack(out).astype(np.float32)


def initialize_orthogonal_filters(c: int, h: int, w: int, key) -> np.ndarray:
    """Mirror of the PyTorch helper (torch.rand -> uniform[0,1))."""
    if h * w < c:
        n = c // (h * w)
        keys = jax.random.split(key, n)
        grams = [
            gram_schmidt_np(
                np.asarray(jax.random.uniform(k, (h * w, 1, h, w), jnp.float32))
            )
            for k in keys
        ]
        return np.concatenate(grams, axis=0)
    rand = np.asarray(jax.random.uniform(key, (c, 1, h, w), jnp.float32))
    return gram_schmidt_np(rand)


def build_gram_schmidt_filter(c: int, h: int, key) -> jnp.ndarray:
    """Constant filter buffer, shape (C, H, W)."""
    filt = initialize_orthogonal_filters(c, h, h, key).reshape(c, h, h)
    return jnp.asarray(filt, dtype=jnp.float32)


# ---------------------------------------------------------------------------
# Pallas kernel: per-(batch, channel) weighted spatial reduction.
# Grid = (channel blocks, batch blocks, HW chunks [reduction, innermost]).
# ---------------------------------------------------------------------------
def _oca_kernel(x_ref, f_ref, o_ref, acc_ref):
    # x_ref: (bt, ct, hwc) native dtype; f_ref: (ct, hwc) x.dtype;
    # o_ref: (bt, ct) f32; acc_ref: (bt, ct) f32 scratch.
    k = pl.program_id(2)

    @pl.when(k == 0)
    def _init():
        acc_ref[...] = jnp.zeros_like(acc_ref)

    # Only this HW chunk is ever live as an f32 temporary (small footprint).
    x = x_ref[...].astype(jnp.float32)
    f = f_ref[...].astype(jnp.float32)
    # NOTE(v7x): if the lane-axis reduce + relayout ever becomes the binding
    # XLU slot at tiny HW, fold this reduce into an MXU matmul with a ones
    # vector (MXU is idle here).  On v5e/v6e the XLU work is free filler.
    acc_ref[...] += jnp.sum(x * f[None, :, :], axis=-1)

    @pl.when(k == pl.num_programs(2) - 1)
    def _store():
        o_ref[...] = acc_ref[...].astype(o_ref.dtype)


# ---------------------------------------------------------------------------
# Generation-aware tile sizing.
# ---------------------------------------------------------------------------
def _device_kind() -> str:
    try:
        return jax.devices()[0].device_kind.lower()
    except Exception:
        return ""


def _vmem_capacity_bytes():
    try:
        return int(pltpu.get_tpu_info().vmem_capacity_bytes)
    except Exception:
        return None


def _resident_budget_bytes():
    """Budget for the full live VMEM set (double-buffered tiles + scratch)."""
    kind = _device_kind()
    cap = _vmem_capacity_bytes()
    if "v7" in kind:
        budget = 28 << 20   # ~8-12 MiB x tiles; total < ~28 MiB of 64 MiB phys
    elif "v6" in kind:
        budget = 40 << 20   # 16-32 MiB x tiles; 128 MiB VMEM holds it easily
    elif "v5" in kind:
        budget = 14 << 20   # keep tiles modest on v5e (slower HBM, spill-shy)
    else:
        budget = 24 << 20   # unknown generation: safe everywhere
    if cap is not None:
        budget = min(budget, int(cap * 0.6))
    return budget, cap


def _pick_tiles(B, C, HW, x_itemsize, f_itemsize, budget):
    """Choose (bt, ct, hwc) honoring (8,128) block constraints and the budget."""
    bt = 8 if B % 8 == 0 else B          # output sublane dim
    ct = 128 if C % 128 == 0 else C      # output lane dim (lane-dense stores)
    hwc = 128 if HW % 128 == 0 else HW   # x / filter lane dim

    def resident(bt_, ct_, hwc_):
        x_tile = bt_ * ct_ * hwc_ * x_itemsize
        f_tile = ct_ * hwc_ * f_itemsize
        o_tile = bt_ * ct_ * 4
        # double-buffered pipeline stages + persistent f32 accumulator.
        return 2 * (x_tile + f_tile + o_tile) + o_tile

    # 1) Grow the batch tile first: it only grows the x tile and it divides the
    #    filter re-fetch count (filter HBM traffic = (B/bt)*C*HW*f_itemsize).
    if B % 8 == 0:
        while B % (bt * 2) == 0 and resident(bt * 2, ct, hwc) <= budget:
            bt *= 2
        if bt < B and resident(B, ct, hwc) <= budget:
            bt = B
    # 2) Grow the HW chunk next (bigger DMAs, fewer grid steps).
    if HW % 128 == 0:
        while HW % (hwc * 2) == 0 and resident(bt, ct, hwc * 2) <= budget:
            hwc *= 2
        if hwc < HW and resident(bt, ct, HW) <= budget:
            hwc = HW
    # 3) Grow the channel tile last (it also grows the filter/output tiles).
    if C % 128 == 0:
        while C % (ct * 2) == 0 and resident(bt, ct * 2, hwc) <= budget:
            ct *= 2

    return bt, ct, hwc, resident(bt, ct, hwc)


# ---------------------------------------------------------------------------
# Wrapper: GramSchmidtTransform.forward
# ---------------------------------------------------------------------------
def fwt_pallas(constant_filter: jnp.ndarray, x: jnp.ndarray) -> jnp.ndarray:
    """GramSchmidtTransform.forward: x (B,C,h,w) -> (B,C,1,1)."""
    B, C, h, w = x.shape
    Cf, H, W = constant_filter.shape
    assert C == Cf

    if (h, w) != (H, W):
        # adaptive_avg_pool2d (evenly divisible case) folded into the constant
        # filter (a linear op), so x is streamed from HBM exactly once.
        # TODO(synk): general (non-divisible) adaptive_avg_pool2d bin logic.
        assert h % H == 0 and w % W == 0, "non-divisible adaptive pool not implemented"
        kh, kw = h // H, w // W
        filt = jnp.repeat(jnp.repeat(constant_filter, kh, axis=1), kw, axis=2)
        filt = filt / float(kh * kw)
    else:
        filt = constant_filter

    HW = h * w
    x_flat = x.reshape(B, C, HW)                        # native dtype, no upcast
    # Filter travels at x's dtype (halves its HBM + VMEM cost for bf16 inputs);
    # accumulation inside the kernel is always f32.
    f_flat = filt.reshape(C, HW).astype(x.dtype)

    budget, cap = _resident_budget_bytes()
    bt, ct, hwc, resident = _pick_tiles(
        B, C, HW, x_flat.dtype.itemsize, f_flat.dtype.itemsize, budget
    )

    # If even the minimum legal tile cannot live in VMEM (huge non-128-aligned
    # spatial/channel extents), compute in XLA rather than fail to compile.
    hard_cap = int(cap * 0.9) if cap is not None else (100 << 20)
    if resident > hard_cap:
        out = jnp.einsum(
            "bcs,cs->bc", x_flat.astype(jnp.float32), f_flat.astype(jnp.float32)
        )
        return out.reshape(B, C, 1, 1)

    # Channel blocks outermost, batch blocks middle, HW chunks innermost.
    # The output block index is constant across the HW axis (accumulator).
    grid = (C // ct, B // bt, HW // hwc)

    # vmem limit from the computed footprint + >=25% headroom; never below the
    # conservative 16 MiB default scoped limit (Mosaic internal scratch).
    vmem_limit = max(int(resident * 1.25), 16 << 20)
    if cap is not None:
        vmem_limit = min(vmem_limit, cap)

    cost = pl.CostEstimate(
        flops=2 * B * C * HW,
        transcendentals=0,
        bytes_accessed=int(
            x_flat.size * x_flat.dtype.itemsize
            + (B // bt) * f_flat.size * f_flat.dtype.itemsize
            + B * C * 4
        ),
    )

    def _call(dim_sems):
        return pl.pallas_call(
            _oca_kernel,
            out_shape=jax.ShapeDtypeStruct((B, C), jnp.float32),
            grid_spec=pltpu.PrefetchScalarGridSpec(
                num_scalar_prefetch=0,
                grid=grid,
                in_specs=[
                    pl.BlockSpec((bt, ct, hwc), lambda j, i, k: (i, j, k)),
                    pl.BlockSpec((ct, hwc), lambda j, i, k: (j, k)),
                ],
                out_specs=pl.BlockSpec((bt, ct), lambda j, i, k: (i, j)),
                scratch_shapes=[pltpu.VMEM((bt, ct), jnp.float32)],
            ),
            compiler_params=pltpu.CompilerParams(
                dimension_semantics=dim_sems,
                vmem_limit_bytes=int(vmem_limit),
            ),
            cost_estimate=cost,
        )(x_flat, f_flat)

    if "v7" in _device_kind():
        # Shard the channel axis across the two TensorCores; each core keeps
        # the per-channel-block filter reuse within its shard.
        try:
            out = _call((pltpu.CORE_PARALLEL, pltpu.PARALLEL, pltpu.ARBITRARY))
        except Exception:
            out = _call(("parallel", "parallel", "arbitrary"))
    else:
        out = _call(("parallel", "parallel", "arbitrary"))

    return out.reshape(B, C, 1, 1)


def attention_forward(constant_filter: jnp.ndarray, x: jnp.ndarray) -> jnp.ndarray:
    """Attention.forward(FWT, input): apply FWT while spatial > 1, view (B,-1)."""
    while x.shape[-1] > 1:
        x = fwt_pallas(constant_filter, x)
    b = x.shape[0]
    return x.reshape(b, -1)


# ---------------------------------------------------------------------------
# Demo / self-check
# ---------------------------------------------------------------------------
if __name__ == "__main__":
    B, C, H = 2, 4, 16  # input: (2, 4, 16, 16), filter: (4, 16, 16)

    key = jax.random.PRNGKey(0)
    k_filter, k_input = jax.random.split(key)

    constant_filter = build_gram_schmidt_filter(C, H, k_filter)   # (C, H, H)
    x = jax.random.normal(k_input, (B, C, H, H), dtype=jnp.float32)

    out = attention_forward(constant_filter, x)
    out = jax.block_until_ready(out)

    # Reference in plain JAX (same math as the PyTorch module).
    ref = jnp.sum(constant_filter[None] * x, axis=(-1, -2)).reshape(B, -1)
    assert out.shape == (B, C)
    assert jnp.allclose(out, ref, atol=1e-5, rtol=1e-5), "mismatch vs reference"

    # Also exercise the (divisible) adaptive-avg-pool path, folded into the filter.
    x2 = jax.random.normal(k_input, (B, C, 2 * H, 2 * H), dtype=jnp.float32)
    out2 = jax.block_until_ready(attention_forward(constant_filter, x2))
    x2_pooled = x2.reshape(B, C, H, 2, H, 2).mean(axis=(3, 5))
    ref2 = jnp.sum(constant_filter[None] * x2_pooled, axis=(-1, -2)).reshape(B, -1)
    assert jnp.allclose(out2, ref2, atol=1e-4, rtol=1e-4), "mismatch (pooled path)"

    print("KERNEL_OK")
</pallas_src>

<mosaic_0001>
module attributes {stable_mosaic.version = 11 : i64} {
  func.func @_oca_kernel(%arg0: i32, %arg1: i32, %arg2: i32, %arg3: memref<2x4x256xf32, #tpu.memory_space<vmem>>, %arg4: memref<4x256xf32, #tpu.memory_space<vmem>>, %arg5: memref<2x4xf32, #tpu.memory_space<vmem>>, %arg6: memref<2x4xf32, #tpu.memory_space<vmem>>) attributes {dimension_semantics = [#tpu.dimension_semantics<parallel>, #tpu.dimension_semantics<parallel>, #tpu.dimension_semantics<arbitrary>], iteration_bounds = array<i64: 1, 1, 1>, scalar_prefetch = 0 : i64, scratch_operands = 1 : i64, tpu.core_type = #tpu.core_type<tc>, window_params = [{transform_indices = @transform_0, window_bounds = array<i64: 2, 4, 256>}, {transform_indices = @transform_1, window_bounds = array<i64: 4, 256>}, {transform_indices = @transform_2, window_bounds = array<i64: 2, 4>}]} {
    %c0_i32 = arith.constant 0 : i32
    %0 = arith.cmpi eq, %arg2, %c0_i32 : i32
    %1 = arith.extui %0 : i1 to i32
    %c0_i32_0 = arith.constant 0 : i32
    %2 = arith.cmpi ne, %1, %c0_i32_0 : i32
    scf.if %2 {
      %cst_11 = arith.constant 0.000000e+00 : f32
      %15 = vector.broadcast %cst_11 : f32 to vector<2x4xf32>
      %c0_12 = arith.constant 0 : index
      %c0_13 = arith.constant 0 : index
      %16 = vector.load %arg6[%c0_12, %c0_13] : memref<2x4xf32, #tpu.memory_space<vmem>>, vector<2x4xf32>
      tpu.vector_store %arg6[%c0_12, %c0_13], %15 {strides = array<i32>} : memref<2x4xf32, #tpu.memory_space<vmem>>, vector<2x4xf32>,
    } else {
    }
    %c0 = arith.constant 0 : index
    %c0_1 = arith.constant 0 : index
    %c0_2 = arith.constant 0 : index
    %3 = vector.load %arg3[%c0, %c0_1, %c0_2] : memref<2x4x256xf32, #tpu.memory_space<vmem>>, vector<2x4x256xf32>
    %c0_3 = arith.constant 0 : index
    %c0_4 = arith.constant 0 : index
    %4 = vector.load %arg4[%c0_3, %c0_4] : memref<4x256xf32, #tpu.memory_space<vmem>>, vector<4x256xf32>
    %c0_5 = arith.constant 0 : index
    %c0_6 = arith.constant 0 : index
    %5 = vector.load %arg6[%c0_5, %c0_6] : memref<2x4xf32, #tpu.memory_space<vmem>>, vector<2x4xf32>
    %6 = vector.shape_cast %4 : vector<4x256xf32> to vector<1x4x256xf32>
    %7 = vector.broadcast %6 : vector<1x4x256xf32> to vector<2x4x256xf32>
    %8 = arith.mulf %3, %7 : vector<2x4x256xf32>
    %cst = arith.constant dense<0.000000e+00> : vector<2x4xf32>
    %9 = vector.multi_reduction <add>, %8, %cst [2] : vector<2x4x256xf32> to vector<2x4xf32>
    %10 = arith.addf %5, %9 : vector<2x4xf32>
    %c0_7 = arith.constant 0 : index
    %c0_8 = arith.constant 0 : index
    %11 = vector.load %arg6[%c0_7, %c0_8] : memref<2x4xf32, #tpu.memory_space<vmem>>, vector<2x4xf32>
    tpu.vector_store %arg6[%c0_7, %c0_8], %10 {strides = array<i32>} : memref<2x4xf32, #tpu.memory_space<vmem>>, vector<2x4xf32>,
    %c0_i32_9 = arith.constant 0 : i32
    %12 = arith.cmpi eq, %arg2, %c0_i32_9 : i32
    %13 = arith.extui %12 : i1 to i32
    %c0_i32_10 = arith.constant 0 : i32
    %14 = arith.cmpi ne, %13, %c0_i32_10 : i32
    scf.if %14 {
      %c0_11 = arith.constant 0 : index
      %c0_12 = arith.constant 0 : index
      %15 = vector.load %arg6[%c0_11, %c0_12] : memref<2x4xf32, #tpu.memory_space<vmem>>, vector<2x4xf32>
      %c0_13 = arith.constant 0 : index
      %c0_14 = arith.constant 0 : index
      %16 = vector.load %arg5[%c0_13, %c0_14] : memref<2x4xf32, #tpu.memory_space<vmem>>, vector<2x4xf32>
      tpu.vector_store %arg5[%c0_13, %c0_14], %15 {strides = array<i32>} : memref<2x4xf32, #tpu.memory_space<vmem>>, vector<2x4xf32>,
    } else {
    }
    return
  }
  func.func @transform_0(%arg0: i32, %arg1: i32, %arg2: i32) -> (i32, i32, i32) {
    %c0_i32 = arith.constant 0 : i32
    return %arg1, %arg0, %arg2 : i32, i32, i32
  }
  func.func @transform_1(%arg0: i32, %arg1: i32, %arg2: i32) -> (i32, i32) {
    %c0_i32 = arith.constant 0 : i32
    return %arg0, %arg2 : i32, i32
  }
  func.func @transform_2(%arg0: i32, %arg1: i32, %arg2: i32) -> (i32, i32) {
    %c0_i32 = arith.constant 0 : i32
    return %arg1, %arg0 : i32, i32
  }
}

</mosaic_0001>

<llo_original>
// kernel: tpu_custom_call.1
$region0: #{tpu_custom_call.1}
  #allocation0 [shape = 'u32[]', space=smem, size = 0x4, offset = 0x4, fixed_abs, tag = 'smem constant byte address 0x4 - core index']
  #allocation1 [shape = 'u32[144,128]{1,0:T(1,128)}', space=vmem, size = 0x12000, scoped, tag = 'internal scratch']
  #allocation2 [shape = 'f32[2,4]{1,0:T(2,128)}', space=vmem, size = 0x400, scoped, tag = 'scratch operand']
  %s0 = inlined_call_operand.hbm [shape: f32[2,4,256], index: 0, kind: input, shape index: {}]
  %s1 = inlined_call_operand.hbm [shape: f32[4,256], index: 1, kind: input, shape index: {}]
  %s2 = inlined_call_operand.hbm [shape: f32[2,4], index: 2, kind: output, shape index: {}]
  %s3 = sld [smem:[#allocation0]]
  $region34: #{tpu_custom_call.1} parent=0
    _
  %s5 = ssub.s32 1, %s3
  %s6 = scalar_select 0, %s5, %s3
  $region1: #{tpu_custom_call.1} parent=0
    #allocation3 [shape = 'u8[8192]{0}', space=vmem, size = 0x2000, scoped, tag = 'input window, operand 0, single buffered']
    #allocation4 [shape = 's32[1]{0}', space=sflag, size = 0x4, scoped, tag = 'scoped memory for tpu_custom_call.1']
    #allocation5 [shape = 's32[1]{0}', space=sflag, size = 0x4, scoped, tag = 'scoped memory for tpu_custom_call.1']
    #allocation6 [shape = 'u8[4096]{0}', space=vmem, size = 0x1000, scoped, tag = 'input window, operand 1, single buffered']
    #allocation7 [shape = 's32[1]{0}', space=sflag, size = 0x4, scoped, tag = 'scoped memory for tpu_custom_call.1']
    #allocation8 [shape = 'u8[1024]{0}', space=vmem, size = 0x400, scoped, tag = 'output window, operand 0, single buffered']
    %7 = vsyncpa [#allocation4], 0
    %8 = vsyncpa [#allocation7], 0
    %9 = vsyncpa [#allocation5], 0
    // Predicated region
    $region2: #{tpu_custom_call.1} parent=1 // pred_check
      _
    $region3: #{tpu_custom_call.1} parent=1 // pred_check_branch
      %11 = sbr.rel (0) target = $region5
    $region4: #{tpu_custom_call.1} parent=1 // pred_region
      %s13 = ssub.s32 256, 256
      %14 = vsyncadd [#allocation4], %s13
      %s15 = sshll.u32 [#allocation3], 4
      %s16 = int_to_ptr.vmem [resolvable:$true] %s15
      %21 = dma.hbm_to_vmem [thread:$0]  %s0, 256, %s16, [#allocation4], 128, 128, 8
    $region5: #{tpu_custom_call.1} parent=1 // pred_fallthru
      _
    // Predicated region
    $region6: #{tpu_custom_call.1} parent=1 // pred_check
      _
    $region7: #{tpu_custom_call.1} parent=1 // pred_check_branch
      %23 = sbr.rel (0) target = $region9
    $region8: #{tpu_custom_call.1} parent=1 // pred_region
      %s25 = ssub.s32 128, 128
      %26 = vsyncadd [#allocation7], %s25
      %s28 = sshll.u32 [#allocation6], 4
      %s29 = int_to_ptr.vmem [resolvable:$true] %s28
      %31 = dma.hbm_to_vmem [thread:$0]  %s1, 128, %s29, [#allocation7]
    $region9: #{tpu_custom_call.1} parent=1 // pred_fallthru
      _
    // Predicated region
    $region10: #{tpu_custom_call.1} parent=1 // pred_check
      _
    $region11: #{tpu_custom_call.1} parent=1 // pred_check_branch
      %33 = sbr.rel (0) target = $region13
    $region12: #{tpu_custom_call.1} parent=1 // pred_region
      %34 = dma.done [#allocation4], 256
    $region13: #{tpu_custom_call.1} parent=1 // pred_fallthru
      _
    // Predicated region
    $region14: #{tpu_custom_call.1} parent=1 // pred_check
      _
    $region15: #{tpu_custom_call.1} parent=1 // pred_check_branch
      %36 = sbr.rel (0) target = $region17
    $region16: #{tpu_custom_call.1} parent=1 // pred_region
      %37 = dma.done [#allocation7], 128
    $region17: #{tpu_custom_call.1} parent=1 // pred_fallthru
      _
    %p38 = scmp.eq.s32.totalorder 0, 0
    // Predicated region
    $region18: #{tpu_custom_call.1} parent=1 // pred_check
      %p39 = pneg %p38
    $region19: #{tpu_custom_call.1} parent=1 // pred_check_branch
      %41 = sbr.rel (%p39) target = $region21
    $region20: #{tpu_custom_call.1} parent=1 // pred_region
      %vm42 = vcmask 25600
      %43 = vst.msk [vmem:[#allocation2] sm:$0x3] %vm42, 0.0
    $region21: #{tpu_custom_call.1} parent=1 // pred_fallthru
      _
    %v44 = vld [vmem:[#allocation3] sm:$0xff]
    %v45 = vld [vmem:[#allocation3 + $0x8] sm:$0xff]
    %v46 = vld [vmem:[#allocation6] sm:$0xff]
    %v47 = vld [vmem:[#allocation2] sm:$0x3]
    %v48 = vmul.f32 %v44, %v46
    %v49 = vmul.f32 %v45, %v46
    %v52 = vcombine.high %v48, %v48
    %v53 = vcombine.high %v49, %v49
    %vm56 = vcmask 1043456
    %v57 = vsel %vm56, %v48, 0.0
    %v58 = vsel %vm56, %v52, 0.0
    %v59 = vadd.f32 %v57, %v58
    %60 = vadd.xlane.f32.xlu0 %v59
    %v61 = vpop.xlane.xlu0 %60
    %v62 = vsel %vm56, %v49, 0.0
    %v63 = vsel %vm56, %v53, 0.0
    %v64 = vadd.f32 %v62, %v63
    %65 = vadd.xlane.f32.xlu0 %v64
    %v66 = vpop.xlane.xlu0 %65
    %v69 = vlaneseq
    %v70 = vand.u32 %v69, 127
    %v71 = vlaneseq
    %v72 = vshrl.u32 %v71, 7
    %v73 = vsub.s32 %v70, %v72
    %v74 = vrot.slane %v61, %v73
    %v75 = vlaneseq
    %v76 = vshrl.u32 %v75, 7
    %v77 = vsub.s32 %v70, %v76
    %v78 = vrot.slane %v66, %v77
    %vm79 = vcmask 1041409
    %v80 = vsel %vm79, %v78, %v74
    %v82 = vadd.f32 %v47, %v80
    %vm83 = vcmask 25600
    %84 = vst.msk [vmem:[#allocation2] sm:$0x3] %vm83, %v82
    // Predicated region
    $region22: #{tpu_custom_call.1} parent=1 // pred_check
      %p85 = pneg %p38
    $region23: #{tpu_custom_call.1} parent=1 // pred_check_branch
      %87 = sbr.rel (%p85) target = $region25
    $region24: #{tpu_custom_call.1} parent=1 // pred_region
      %v88 = vld [vmem:[#allocation2] sm:$0x3]
      %89 = vst.msk [vmem:[#allocation8] sm:$0x3] %vm83, %v88
    $region25: #{tpu_custom_call.1} parent=1 // pred_fallthru
      _
    // Predicated region
    $region26: #{tpu_custom_call.1} parent=1 // pred_check
      _
    $region27: #{tpu_custom_call.1} parent=1 // pred_check_branch
      %91 = sbr.rel (0) target = $region29
    $region28: #{tpu_custom_call.1} parent=1 // pred_region
      %s93 = ssub.s32 32, 32
      %94 = vsyncadd [#allocation5], %s93
      %s96 = sshll.u32 [#allocation8], 4
      %s97 = int_to_ptr.vmem [resolvable:$true] %s96
      %99 = dma.vmem_to_hbm [thread:$0]  %s97, 32, %s2, [#allocation5]
    $region29: #{tpu_custom_call.1} parent=1 // pred_fallthru
      _
    // Predicated region
    $region30: #{tpu_custom_call.1} parent=1 // pred_check
      _
    $region31: #{tpu_custom_call.1} parent=1 // pred_check_branch
      %101 = sbr.rel (0) target = $region33
    $region32: #{tpu_custom_call.1} parent=1 // pred_region
      %102 = dma.done [#allocation5], 32
    $region33: #{tpu_custom_call.1} parent=1 // pred_fallthru
      _
    %103 = vsyncpa [#allocation4], 1
    %104 = vsyncpa [#allocation7], 1
    %105 = vsyncpa [#allocation5], 1

</llo_original>
